<compile_context>
chip_gen: v5e
topology: v5e:2x2
jax: 0.10.0
libtpu: 0.0.40
codegen_flags: <defaults>
</compile_context>

<pallas_src>
import jax
import jax.numpy as jnp
from jax.experimental import pallas as pl
from jax.experimental.pallas import tpu as pltpu


def _pick_view(n: int) -> tuple[int, ...]:
    """Choose a flat view of the tensor for the HBM->HBM DMA.

    A 2-D lane-dense view is preferred (nicer DMA descriptors); sizes not
    divisible by 128 fall back to a plain 1-D view, which is fine because the
    DMA path never touches vregs.
    """
    for cols in (2048, 1024, 512, 256, 128):
        if n % cols == 0:
            return (n // cols, cols)
    return (n,)


def _make_hbm_copy_kernel(row_bounds):
    """Kernel issuing one HBM->HBM DMA per static chunk, all started first."""
    n_chunks = len(row_bounds) - 1

    def kernel(x_hbm, o_hbm, sem):
        copies = []
        for i in range(n_chunks):
            start = row_bounds[i]
            size = row_bounds[i + 1] - start
            cp = pltpu.make_async_copy(
                x_hbm.at[pl.ds(start, size)],
                o_hbm.at[pl.ds(start, size)],
                sem.at[i],
            )
            cp.start()
            copies.append(cp)
        for cp in copies:
            cp.wait()

    return kernel


def copy_tensor(x: jax.Array) -> jax.Array:
    """Pallas TPU implementation of the CopyTensor custom op (identity copy)."""
    orig_shape = x.shape

    if x.size == 0:
        # Nothing to copy for an empty tensor.
        return x

    n = int(x.size)
    view = _pick_view(n)
    xv = x.reshape(view)

    itemsize = jnp.dtype(x.dtype).itemsize
    total_bytes = n * itemsize
    lead = view[0]

    # Up to 4 back-to-back DMAs, each at least ~1 MiB, never more chunks than
    # rows along the leading axis.  Boundaries are static Python ints.
    n_chunks = int(max(1, min(4, total_bytes // (1 << 20), lead)))
    row_bounds = [(lead * i) // n_chunks for i in range(n_chunks + 1)]

    kernel = _make_hbm_copy_kernel(row_bounds)

    out = pl.pallas_call(
        kernel,
        out_shape=jax.ShapeDtypeStruct(view, x.dtype),
        in_specs=[pl.BlockSpec(memory_space=pl.ANY)],   # raw HBM ref, no auto-DMA
        out_specs=pl.BlockSpec(memory_space=pl.ANY),    # raw HBM ref, written via DMA
        scratch_shapes=[pltpu.SemaphoreType.DMA((n_chunks,))],
    )(xv)

    return out.reshape(orig_shape)


if __name__ == "__main__":
    key = jax.random.PRNGKey(0)
    # Small NCHW input consistent with a detection-model activation.
    x = jax.random.normal(key, (2, 4, 16, 16), dtype=jnp.float32)

    y = copy_tensor(x)
    y = jax.block_until_ready(y)

    assert y.shape == x.shape
    assert y.dtype == x.dtype
    assert bool(jnp.array_equal(y, x))

    print("KERNEL_OK")
</pallas_src>

<mosaic_0001>
module attributes {stable_mosaic.version = 11 : i64} {
  func.func @kernel(%arg0: memref<1x2048xf32, #tpu.memory_space<any>>, %arg1: memref<1x2048xf32, #tpu.memory_space<any>>, %arg2: memref<1x!tpu.dma_semaphore, #tpu.memory_space<semaphore_mem>>) attributes {dimension_semantics = [], scalar_prefetch = 0 : i64, scratch_operands = 1 : i64, tpu.core_type = #tpu.core_type<tc>} {
    %c0_i32 = arith.constant 0 : i32
    %c0_i32_0 = arith.constant 0 : i32
    %c0_i32_1 = arith.constant 0 : i32
    %0 = tpu.memref_slice %arg0[%c0_i32_0, %c0_i32_1] : memref<1x2048xf32, #tpu.memory_space<any>> -> memref<1x2048xf32, #tpu.memory_space<any>>
    %c0_i32_2 = arith.constant 0 : i32
    %c0_i32_3 = arith.constant 0 : i32
    %1 = tpu.memref_slice %arg1[%c0_i32_2, %c0_i32_3] : memref<1x2048xf32, #tpu.memory_space<any>> -> memref<1x2048xf32, #tpu.memory_space<any>>
    %2 = tpu.memref_slice %arg2[%c0_i32] : memref<1x!tpu.dma_semaphore, #tpu.memory_space<semaphore_mem>> -> memref<1x!tpu.dma_semaphore, #tpu.memory_space<semaphore_mem>>
    %3 = tpu.memref_squeeze %2 : memref<1x!tpu.dma_semaphore, #tpu.memory_space<semaphore_mem>> -> memref<!tpu.dma_semaphore, #tpu.memory_space<semaphore_mem>>
    tpu.enqueue_dma source(%0 : memref<1x2048xf32, #tpu.memory_space<any>>) target(%1 : memref<1x2048xf32, #tpu.memory_space<any>>) target_semaphore(%3 : memref<!tpu.dma_semaphore, #tpu.memory_space<semaphore_mem>>)
    %c0_i32_4 = arith.constant 0 : i32
    %c0_i32_5 = arith.constant 0 : i32
    %c0_i32_6 = arith.constant 0 : i32
    %4 = tpu.memref_slice %arg0[%c0_i32_5, %c0_i32_6] : memref<1x2048xf32, #tpu.memory_space<any>> -> memref<1x2048xf32, #tpu.memory_space<any>>
    %c0_i32_7 = arith.constant 0 : i32
    %c0_i32_8 = arith.constant 0 : i32
    %5 = tpu.memref_slice %arg1[%c0_i32_7, %c0_i32_8] : memref<1x2048xf32, #tpu.memory_space<any>> -> memref<1x2048xf32, #tpu.memory_space<any>>
    %6 = tpu.memref_slice %arg2[%c0_i32_4] : memref<1x!tpu.dma_semaphore, #tpu.memory_space<semaphore_mem>> -> memref<1x!tpu.dma_semaphore, #tpu.memory_space<semaphore_mem>>
    %7 = tpu.memref_squeeze %6 : memref<1x!tpu.dma_semaphore, #tpu.memory_space<semaphore_mem>> -> memref<!tpu.dma_semaphore, #tpu.memory_space<semaphore_mem>>
    tpu.wait_dma2 semaphore(%7 : memref<!tpu.dma_semaphore, #tpu.memory_space<semaphore_mem>>) src(%4 : memref<1x2048xf32, #tpu.memory_space<any>>) dst(%5 : memref<1x2048xf32, #tpu.memory_space<any>>)
    return
  }
}

</mosaic_0001>

<llo_original>
// kernel: tpu_custom_call.1
$region0: #{tpu_custom_call.1}
  #allocation0 [shape = 'u32[]', space=smem, size = 0x4, offset = 0x4, fixed_abs, tag = 'smem constant byte address 0x4 - core index']
  #allocation1 [shape = 'u32[72,128]{1,0:T(1,128)}', space=vmem, size = 0x9000, scoped, tag = 'internal scratch']
  #allocation2 [shape = 's32[1]{0}', space=sflag, size = 0x4, scoped, tag = 'scratch operand']
  #allocation3 [shape = 's32[]', space=sflag, size = 0x4, offset = 0, fixed_abs, tag = 'sflag constant byte address 0x0 - dummy sync flag']
  #allocation4 [shape = 'u32[0]{0}', space=smem, size = 0, offset = 0, fixed_abs, tag = 'smem constant byte address 0x0 - null']
  %s0 = inlined_call_operand.hbm [shape: f32[1,2048], index: 0, kind: input, shape index: {}]
  %s1 = inlined_call_operand.hbm [shape: f32[1,2048], index: 1, kind: output, shape index: {}]
  %s2 = sld [smem:[#allocation0]]
  $region2: #{tpu_custom_call.1} parent=0
    _
  %s4 = ssub.s32 1, %s2
  %s5 = scalar_select 0, %s4, %s2
  %s7 = sshll.u32 1, 14
  %s8 = sxor.u32 4294967295, %s7
  %s10 = sshll.u32 %s0, 4
  %s11 = int_to_ptr.hbm [resolvable:$true] %s10
  %s12 = sshll.u32 %s1, 4
  %s13 = int_to_ptr.hbm [resolvable:$true] %s12
  %16 = dma.general %s11, 256, %s13, [#allocation2], [#allocation3], [#allocation4], 0, 0
  %s17 = smul.u32 1, 16
  %s18 = sshll.u32 %s17, 4
  %19 = dma.done [#allocation2], %s18
  %20 = vsyncmov [#allocation2]
  %s21 = vpop.sfrf %20
  %p22 = scmp.eq.s32.totalorder %s21, 0
  %p23 = pneg %p22
  %25 = shalt.err (%p23)

</llo_original>
